<compile_context>
chip_gen: v7x
topology: tpu7x:2x2x1
jax: 0.10.0
libtpu: 0.0.40
codegen_flags: <defaults>
</compile_context>

<pallas_src>
import functools

import jax
import jax.numpy as jnp
from jax.experimental import pallas as pl
from jax.experimental.pallas import tpu as pltpu


def _bert_output_kernel(x_ref, w_ref, b_ref, res_ref, g_ref, beta_ref, o_ref, *, eps):
    # One (block_m, H) output slab per program: full-K bf16 matmul on the MXU with
    # f32 accumulation, then fused bias + residual + LayerNorm epilogue (VPU/XLU/EUP
    # work rides in otherwise-idle VLIW slots while the kernel is MXU-bound).
    x = x_ref[...].astype(jnp.bfloat16)
    w = w_ref[...]  # already bf16 (cast once in the wrapper; resident across the grid)
    y = jnp.dot(x, w, preferred_element_type=jnp.float32)
    y = y + b_ref[...].astype(jnp.float32)
    # TODO(synk): dropout is identity here (inference / p=0); training-mode dropout
    # would use pltpu.prng_seed + pltpu.prng_random_bits to build a keep-mask.
    y = y + res_ref[...].astype(jnp.float32)

    # LayerNorm over the hidden dim (last / lane axis), eps placement matches torch (1e-12).
    mean = jnp.mean(y, axis=-1, keepdims=True)
    centered = y - mean
    var = jnp.mean(centered * centered, axis=-1, keepdims=True)
    inv = jax.lax.rsqrt(var + eps)
    out = centered * inv * g_ref[...].astype(jnp.float32) + beta_ref[...].astype(jnp.float32)
    o_ref[...] = out.astype(o_ref.dtype)


@functools.partial(jax.jit, static_argnames=("eps", "tm"))
def bert_output(hidden_states, input_tensor, weight, bias, gamma, beta, *,
                eps=1e-12, tm=512):
    """LayerNorm(hidden_states @ weight + bias + input_tensor).

    hidden_states: (B, S, I)        weight: (I, H)  (== torch nn.Linear weight.T)
    input_tensor:  (B, S, H)        bias / gamma / beta: (H,)
    returns:       (B, S, H)
    """
    B, S, I = hidden_states.shape
    H = input_tensor.shape[-1]
    M = B * S

    x2d = hidden_states.reshape(M, I)
    r2d = input_tensor.reshape(M, H)
    # Weight is grid-invariant and resident in VMEM: cast once to bf16 so the MXU runs
    # at bf16 throughput and the resident footprint / one-time DMA is halved.
    w_bf16 = weight.astype(jnp.bfloat16)
    b2d = bias.reshape(1, H)
    g2d = gamma.reshape(1, H)
    be2d = beta.reshape(1, H)

    # Row tiling only: full K (=I) and full N (=H) per program -> one big MXU matmul,
    # no accumulator scratch / reduction axis, and the LayerNorm (which needs the whole
    # H row) fuses into the same program.  block_m is sublane-aligned; the partial last
    # block is masked by Pallas (no HBM pad / slice copies needed).
    block_m = max(8, min(tm, -(-M // 8) * 8))
    block_m = -(-block_m // 8) * 8
    grid = (pl.cdiv(M, block_m),)

    x_bytes = jnp.dtype(hidden_states.dtype).itemsize
    r_bytes = jnp.dtype(input_tensor.dtype).itemsize
    o_bytes = x_bytes

    # Explicit VMEM budget: resident bf16 W + single-buffered bias/gamma/beta,
    # double-buffered X / residual / output tiles, plus f32 epilogue intermediates.
    vmem_need = (
        I * H * 2                        # W (bf16, Buffered(1))
        + 3 * H * 4                      # bias / gamma / beta
        + 2 * block_m * I * x_bytes      # X tiles (double-buffered)
        + 2 * block_m * H * r_bytes      # residual tiles
        + 2 * block_m * H * o_bytes      # output tiles
        + 2 * block_m * H * 4            # f32 y / LN intermediates
    )
    vmem_limit = int(min(max(int(vmem_need * 1.5), 32 * 1024 * 1024),
                         64 * 1024 * 1024))

    cost = pl.CostEstimate(
        flops=2 * M * I * H,
        transcendentals=0,
        bytes_accessed=(M * I * x_bytes + I * H * 2 + 3 * H * 4
                        + M * H * r_bytes + M * H * o_bytes),
    )

    invariant = pl.Buffered(1)  # grid-invariant operands: DMA'd once, single buffer

    out2d = pl.pallas_call(
        functools.partial(_bert_output_kernel, eps=eps),
        out_shape=jax.ShapeDtypeStruct((M, H), hidden_states.dtype),
        grid_spec=pltpu.PrefetchScalarGridSpec(
            num_scalar_prefetch=0,
            grid=grid,
            in_specs=[
                pl.BlockSpec((block_m, I), lambda i: (i, 0)),               # X row-tile (full K)
                pl.BlockSpec((I, H), lambda i: (0, 0),
                             pipeline_mode=invariant),                      # W: resident, single-buffered
                pl.BlockSpec((1, H), lambda i: (0, 0),
                             pipeline_mode=invariant),                      # dense bias
                pl.BlockSpec((block_m, H), lambda i: (i, 0)),               # residual row-tile
                pl.BlockSpec((1, H), lambda i: (0, 0),
                             pipeline_mode=invariant),                      # LayerNorm gamma
                pl.BlockSpec((1, H), lambda i: (0, 0),
                             pipeline_mode=invariant),                      # LayerNorm beta
            ],
            out_specs=pl.BlockSpec((block_m, H), lambda i: (i, 0)),
        ),
        compiler_params=pltpu.CompilerParams(
            dimension_semantics=("parallel",),
            vmem_limit_bytes=vmem_limit,
        ),
        cost_estimate=cost,
    )(x2d, w_bf16, b2d, r2d, g2d, be2d)

    return out2d.reshape(B, S, H)


if __name__ == "__main__":
    # Small config consistent with BertOutput:
    #   intermediate_size=128, hidden_size=32, eps=1e-12, dropout in eval mode.
    # (Note: H=32 < one lane width -> masked stores; real BERT H=768/1024 is lane-dense.)
    batch, seq, hidden, intermediate = 2, 8, 32, 128

    key = jax.random.PRNGKey(0)
    k_x, k_r, k_w, k_b, k_g, k_be = jax.random.split(key, 6)

    hidden_states = jax.random.normal(k_x, (batch, seq, intermediate), dtype=jnp.float32)
    input_tensor = jax.random.normal(k_r, (batch, seq, hidden), dtype=jnp.float32)

    # nn.Linear-like fan-in scaled init (weight given in (in, out) = (I, H) layout).
    bound = 1.0 / intermediate ** 0.5
    weight = jax.random.uniform(k_w, (intermediate, hidden), dtype=jnp.float32,
                                minval=-bound, maxval=bound)
    bias = jax.random.uniform(k_b, (hidden,), dtype=jnp.float32,
                              minval=-bound, maxval=bound)
    gamma = 1.0 + 0.01 * jax.random.normal(k_g, (hidden,), dtype=jnp.float32)
    beta = 0.01 * jax.random.normal(k_be, (hidden,), dtype=jnp.float32)

    out = bert_output(hidden_states, input_tensor, weight, bias, gamma, beta)
    out = jax.block_until_ready(out)

    # Pure-JAX f32 reference (dropout is identity in eval mode).  The kernel matmuls
    # in bf16 (f32 accumulation), so allow ~1e-2-level deltas.
    y = jnp.einsum("bsi,ih->bsh", hidden_states, weight) + bias + input_tensor
    mean = y.mean(-1, keepdims=True)
    var = ((y - mean) ** 2).mean(-1, keepdims=True)
    ref = (y - mean) * jax.lax.rsqrt(var + 1e-12) * gamma + beta

    assert out.shape == (batch, seq, hidden)
    assert jnp.allclose(out, ref, atol=2e-2, rtol=2e-2), float(jnp.abs(out - ref).max())

    print("KERNEL_OK")
</pallas_src>

<mosaic_0001>
module attributes {stable_mosaic.version = 11 : i64} {
  func.func @_bert_output_kernel(%arg0: i32, %arg1: memref<16x128xf32, #tpu.memory_space<vmem>>, %arg2: memref<128x32xbf16, #tpu.memory_space<vmem>>, %arg3: memref<1x32xf32, #tpu.memory_space<vmem>>, %arg4: memref<16x32xf32, #tpu.memory_space<vmem>>, %arg5: memref<1x32xf32, #tpu.memory_space<vmem>>, %arg6: memref<1x32xf32, #tpu.memory_space<vmem>>, %arg7: memref<16x32xf32, #tpu.memory_space<vmem>>) attributes {dimension_semantics = [#tpu.dimension_semantics<parallel>], iteration_bounds = array<i64: 1>, scalar_prefetch = 0 : i64, scratch_operands = 0 : i64, tpu.core_type = #tpu.core_type<tc>, window_params = [{transform_indices = @transform_0, window_bounds = array<i64: 16, 128>}, {pipeline_mode = #tpu.pipeline_mode<synchronous>, transform_indices = @transform_1, window_bounds = array<i64: 128, 32>}, {pipeline_mode = #tpu.pipeline_mode<synchronous>, transform_indices = @transform_2, window_bounds = array<i64: 1, 32>}, {transform_indices = @transform_3, window_bounds = array<i64: 16, 32>}, {pipeline_mode = #tpu.pipeline_mode<synchronous>, transform_indices = @transform_4, window_bounds = array<i64: 1, 32>}, {pipeline_mode = #tpu.pipeline_mode<synchronous>, transform_indices = @transform_5, window_bounds = array<i64: 1, 32>}, {transform_indices = @transform_6, window_bounds = array<i64: 16, 32>}]} {
    %c0 = arith.constant 0 : index
    %c0_0 = arith.constant 0 : index
    %0 = vector.load %arg1[%c0, %c0_0] : memref<16x128xf32, #tpu.memory_space<vmem>>, vector<16x128xf32>
    %1 = arith.truncf %0 : vector<16x128xf32> to vector<16x128xbf16>
    %c0_1 = arith.constant 0 : index
    %c0_2 = arith.constant 0 : index
    %2 = vector.load %arg2[%c0_1, %c0_2] : memref<128x32xbf16, #tpu.memory_space<vmem>>, vector<128x32xbf16>
    %cst = arith.constant dense<0.000000e+00> : vector<16x32xf32>
    %3 = tpu.matmul %1, %2, %cst {dimension_numbers = #tpu.dot_dimension_numbers<[1], [0], [0], [1], [0, 0, 1, 1], [], []>} : vector<16x128xbf16>, vector<128x32xbf16>, vector<16x32xf32> -> vector<16x32xf32>
    %c0_3 = arith.constant 0 : index
    %c0_4 = arith.constant 0 : index
    %4 = vector.load %arg3[%c0_3, %c0_4] : memref<1x32xf32, #tpu.memory_space<vmem>>, vector<1x32xf32>
    %5 = vector.broadcast %4 : vector<1x32xf32> to vector<16x32xf32>
    %6 = arith.addf %3, %5 : vector<16x32xf32>
    %c0_5 = arith.constant 0 : index
    %c0_6 = arith.constant 0 : index
    %7 = vector.load %arg4[%c0_5, %c0_6] : memref<16x32xf32, #tpu.memory_space<vmem>>, vector<16x32xf32>
    %8 = arith.addf %6, %7 : vector<16x32xf32>
    %cst_7 = arith.constant dense<0.000000e+00> : vector<16xf32>
    %9 = vector.multi_reduction <add>, %8, %cst_7 [1] : vector<16x32xf32> to vector<16xf32>
    %10 = vector.shape_cast %9 : vector<16xf32> to vector<16x1xf32>
    %cst_8 = arith.constant 3.200000e+01 : f32
    %11 = vector.broadcast %cst_8 : f32 to vector<16x1xf32>
    %12 = arith.divf %10, %11 : vector<16x1xf32>
    %13 = vector.broadcast %12 : vector<16x1xf32> to vector<16x32xf32>
    %14 = arith.subf %8, %13 : vector<16x32xf32>
    %15 = arith.mulf %14, %14 : vector<16x32xf32>
    %cst_9 = arith.constant dense<0.000000e+00> : vector<16xf32>
    %16 = vector.multi_reduction <add>, %15, %cst_9 [1] : vector<16x32xf32> to vector<16xf32>
    %17 = vector.shape_cast %16 : vector<16xf32> to vector<16x1xf32>
    %cst_10 = arith.constant 3.200000e+01 : f32
    %18 = vector.broadcast %cst_10 : f32 to vector<16x1xf32>
    %19 = arith.divf %17, %18 : vector<16x1xf32>
    %cst_11 = arith.constant 9.99999996E-13 : f32
    %20 = vector.broadcast %cst_11 : f32 to vector<16x1xf32>
    %21 = arith.addf %19, %20 : vector<16x1xf32>
    %22 = math.rsqrt %21 : vector<16x1xf32>
    %23 = vector.broadcast %22 : vector<16x1xf32> to vector<16x32xf32>
    %24 = arith.mulf %14, %23 : vector<16x32xf32>
    %c0_12 = arith.constant 0 : index
    %c0_13 = arith.constant 0 : index
    %25 = vector.load %arg5[%c0_12, %c0_13] : memref<1x32xf32, #tpu.memory_space<vmem>>, vector<1x32xf32>
    %26 = vector.broadcast %25 : vector<1x32xf32> to vector<16x32xf32>
    %27 = arith.mulf %24, %26 : vector<16x32xf32>
    %c0_14 = arith.constant 0 : index
    %c0_15 = arith.constant 0 : index
    %28 = vector.load %arg6[%c0_14, %c0_15] : memref<1x32xf32, #tpu.memory_space<vmem>>, vector<1x32xf32>
    %29 = vector.broadcast %28 : vector<1x32xf32> to vector<16x32xf32>
    %30 = arith.addf %27, %29 : vector<16x32xf32>
    %c0_16 = arith.constant 0 : index
    %c0_17 = arith.constant 0 : index
    %31 = vector.load %arg7[%c0_16, %c0_17] : memref<16x32xf32, #tpu.memory_space<vmem>>, vector<16x32xf32>
    tpu.vector_store %arg7[%c0_16, %c0_17], %30 {strides = array<i32>} : memref<16x32xf32, #tpu.memory_space<vmem>>, vector<16x32xf32>,
    return
  }
  func.func @transform_0(%arg0: i32) -> (i32, i32) {
    %c0_i32 = arith.constant 0 : i32
    %c0_i32_0 = arith.constant 0 : i32
    return %arg0, %c0_i32 : i32, i32
  }
  func.func @transform_1(%arg0: i32) -> (i32, i32) {
    %c0_i32 = arith.constant 0 : i32
    %c0_i32_0 = arith.constant 0 : i32
    %c0_i32_1 = arith.constant 0 : i32
    return %c0_i32, %c0_i32_0 : i32, i32
  }
  func.func @transform_2(%arg0: i32) -> (i32, i32) {
    %c0_i32 = arith.constant 0 : i32
    %c0_i32_0 = arith.constant 0 : i32
    %c0_i32_1 = arith.constant 0 : i32
    return %c0_i32, %c0_i32_0 : i32, i32
  }
  func.func @transform_3(%arg0: i32) -> (i32, i32) {
    %c0_i32 = arith.constant 0 : i32
    %c0_i32_0 = arith.constant 0 : i32
    return %arg0, %c0_i32 : i32, i32
  }
  func.func @transform_4(%arg0: i32) -> (i32, i32) {
    %c0_i32 = arith.constant 0 : i32
    %c0_i32_0 = arith.constant 0 : i32
    %c0_i32_1 = arith.constant 0 : i32
    return %c0_i32, %c0_i32_0 : i32, i32
  }
  func.func @transform_5(%arg0: i32) -> (i32, i32) {
    %c0_i32 = arith.constant 0 : i32
    %c0_i32_0 = arith.constant 0 : i32
    %c0_i32_1 = arith.constant 0 : i32
    return %c0_i32, %c0_i32_0 : i32, i32
  }
  func.func @transform_6(%arg0: i32) -> (i32, i32) {
    %c0_i32 = arith.constant 0 : i32
    %c0_i32_0 = arith.constant 0 : i32
    return %arg0, %c0_i32 : i32, i32
  }
}

</mosaic_0001>

<llo_original>
// kernel: bert_output.1
$region0: #{bert_output.1}
  #allocation0 [shape = 'u32[]', space=smem, size = 0x4, offset = 0x4, fixed_abs, tag = 'smem constant byte address 0x4 - core index']
  #allocation1 [shape = 'u32[144,128]{1,0:T(1,128)}', space=vmem, size = 0x12000, scoped, tag = 'internal scratch']
  %s0 = inlined_call_operand.vmem [shape: f32[16,128], index: 0, kind: input, shape index: {}]
  %s1 = inlined_call_operand.vmem [shape: bf16[128,32], index: 1, kind: input, shape index: {}]
  %s2 = inlined_call_operand.vmem [shape: f32[1,32], index: 2, kind: input, shape index: {}]
  %s3 = inlined_call_operand.vmem [shape: f32[16,32], index: 3, kind: input, shape index: {}]
  %s4 = inlined_call_operand.vmem [shape: f32[1,32], index: 4, kind: input, shape index: {}]
  %s5 = inlined_call_operand.vmem [shape: f32[1,32], index: 5, kind: input, shape index: {}]
  %s6 = inlined_call_operand.hbm [shape: f32[16,32], index: 6, kind: output, shape index: {}]
  %s7 = sld [smem:[#allocation0]]
  $region34: #{bert_output.1} parent=0
    _
  %s9 = ssub.s32 1, %s7
  %s10 = scalar_select 0, %s9, %s7
  $region1: #{bert_output.1} parent=0
    #allocation2 [shape = 'u8[8192]{0}', space=vmem, size = 0x2000, scoped, tag = 'output window, operand 0, single buffered']
    #allocation3 [shape = 's32[1]{0}', space=sflag, size = 0x4, scoped, tag = 'scoped memory for bert_output.1']
    %11 = vsyncpa [#allocation3], 0
    // Predicated region
    $region2: #{bert_output.1} parent=1 // pred_check
      _
    $region3: #{bert_output.1} parent=1 // pred_check_branch
      %13 = sbr.rel (0) target = $region5
    $region4: #{bert_output.1} parent=1 // pred_region
      _
    $region5: #{bert_output.1} parent=1 // pred_fallthru
      _
    // Predicated region
    $region6: #{bert_output.1} parent=1 // pred_check
      _
    $region7: #{bert_output.1} parent=1 // pred_check_branch
      %15 = sbr.rel (0) target = $region9
    $region8: #{bert_output.1} parent=1 // pred_region
      _
    $region9: #{bert_output.1} parent=1 // pred_fallthru
      _
    // Predicated region
    $region10: #{bert_output.1} parent=1 // pred_check
      _
    $region11: #{bert_output.1} parent=1 // pred_check_branch
      %17 = sbr.rel (0) target = $region13
    $region12: #{bert_output.1} parent=1 // pred_region
      _
    $region13: #{bert_output.1} parent=1 // pred_fallthru
      _
    // Predicated region
    $region14: #{bert_output.1} parent=1 // pred_check
      _
    $region15: #{bert_output.1} parent=1 // pred_check_branch
      %19 = sbr.rel (0) target = $region17
    $region16: #{bert_output.1} parent=1 // pred_region
      _
    $region17: #{bert_output.1} parent=1 // pred_fallthru
      _
    // Predicated region
    $region18: #{bert_output.1} parent=1 // pred_check
      _
    $region19: #{bert_output.1} parent=1 // pred_check_branch
      %21 = sbr.rel (0) target = $region21
    $region20: #{bert_output.1} parent=1 // pred_region
      _
    $region21: #{bert_output.1} parent=1 // pred_fallthru
      _
    // Predicated region
    $region22: #{bert_output.1} parent=1 // pred_check
      _
    $region23: #{bert_output.1} parent=1 // pred_check_branch
      %23 = sbr.rel (0) target = $region25
    $region24: #{bert_output.1} parent=1 // pred_region
      _
    $region25: #{bert_output.1} parent=1 // pred_fallthru
      _
    %v25 = vld [vmem:[%s0] sm:$0xff]
    %v26 = vld [vmem:[%s0 + $0x8] sm:$0xff]
    %v27 = vpack.c.bf16 %v26, %v25
    %v28 = vld [vmem:[%s1] sm:$0xf]
    %v29 = vld [vmem:[%s1 + $0x4] sm:$0xf]
    %v30 = vld [vmem:[%s1 + $0x8] sm:$0xf]
    %v31 = vld [vmem:[%s1 + $0xc] sm:$0xf]
    %v32 = vld [vmem:[%s1 + $0x10] sm:$0xf]
    %v33 = vld [vmem:[%s1 + $0x14] sm:$0xf]
    %v34 = vld [vmem:[%s1 + $0x18] sm:$0xf]
    %v35 = vld [vmem:[%s1 + $0x1c] sm:$0xf]
    %v36 = vld [vmem:[%s1 + $0x20] sm:$0xf]
    %v37 = vld [vmem:[%s1 + $0x24] sm:$0xf]
    %v38 = vld [vmem:[%s1 + $0x28] sm:$0xf]
    %v39 = vld [vmem:[%s1 + $0x2c] sm:$0xf]
    %v40 = vld [vmem:[%s1 + $0x30] sm:$0xf]
    %v41 = vld [vmem:[%s1 + $0x34] sm:$0xf]
    %v42 = vld [vmem:[%s1 + $0x38] sm:$0xf]
    %v43 = vld [vmem:[%s1 + $0x3c] sm:$0xf]
    %v44 = vld [vmem:[%s2] sm:$0x1]
    %v46 = vlaneseq
    %v47 = vshrl.u32 %v46, 7
    %v48 = vsub.s32 0, %v47
    %v49 = vrot.slane %v44, %v48
    %v67 = vunpack.c.l.b16 %v28
    %v68 = vunpack.c.l.b16 %v29
    %v69 = vunpack.c.l.b16 %v30
    %v70 = vunpack.c.l.b16 %v31
    %v71 = vunpack.c.l.b16 %v32
    %v72 = vunpack.c.l.b16 %v33
    %v73 = vunpack.c.l.b16 %v34
    %v74 = vunpack.c.l.b16 %v35
    %v75 = vunpack.c.l.b16 %v36
    %v76 = vunpack.c.l.b16 %v37
    %v77 = vunpack.c.l.b16 %v38
    %v78 = vunpack.c.l.b16 %v39
    %v79 = vunpack.c.l.b16 %v40
    %v80 = vunpack.c.l.b16 %v41
    %v81 = vunpack.c.l.b16 %v42
    %v82 = vunpack.c.l.b16 %v43
    %v83 = vpack.c.b16 %v68, %v67
    %v84 = vpack.c.b16 %v70, %v69
    %v85 = vpack.c.b16 %v72, %v71
    %v86 = vpack.c.b16 %v74, %v73
    %v87 = vpack.c.b16 %v76, %v75
    %v88 = vpack.c.b16 %v78, %v77
    %v89 = vpack.c.b16 %v80, %v79
    %v90 = vpack.c.b16 %v82, %v81
    %99 = vmatprep.subr.bf16.mxu0 0
    %100 = vmatpush1.bf16.msra.mxu0 %v83
    %101 = vmatprep.subr.bf16.mxu0 0
    %102 = vmatpush1.bf16.msra.mxu0 %v84
    %103 = vmatprep.subr.bf16.mxu0 0
    %104 = vmatpush1.bf16.msra.mxu0 %v85
    %105 = vmatprep.subr.bf16.mxu0 0
    %106 = vmatpush1.bf16.msra.mxu0 %v86
    %107 = vmatprep.subr.bf16.mxu0 0
    %108 = vmatpush1.bf16.msra.mxu0 %v87
    %109 = vmatprep.subr.bf16.mxu0 0
    %110 = vmatpush1.bf16.msra.mxu0 %v88
    %111 = vmatprep.subr.bf16.mxu0 0
    %112 = vmatpush1.bf16.msra.mxu0 %v89
    %113 = vmatprep.subr.bf16.mxu0 0
    %114 = vmatpush1.bf16.msra.mxu0 %v90
    %115 = vmatprep.subr.bf16.mxu0 0
    %116 = vmatpush1.bf16.msra.mxu0 0
    %117 = vmatprep.subr.bf16.mxu0 0
    %118 = vmatpush1.bf16.msra.mxu0 0
    %119 = vmatprep.subr.bf16.mxu0 0
    %120 = vmatpush1.bf16.msra.mxu0 0
    %121 = vmatprep.subr.bf16.mxu0 0
    %122 = vmatpush1.bf16.msra.mxu0 0
    %123 = vmatprep.subr.bf16.mxu0 0
    %124 = vmatpush1.bf16.msra.mxu0 0
    %125 = vmatprep.subr.bf16.mxu0 0
    %126 = vmatpush1.bf16.msra.mxu0 0
    %127 = vmatprep.subr.bf16.mxu0 0
    %128 = vmatpush1.bf16.msra.mxu0 0
    %129 = vmatprep.subr.bf16.mxu0 0
    %130 = vmatpush1.bf16.msra.mxu0 0
    %131 = vmatprep.mubr.bf16.mxu0 0
    %132 = vmatmul.mubr.bf16.gmra.mrb[0].mxu0 %v27
    %v133 = vpop.f32.mrb[0].mxu0
    %v134 = vadd.f32 %v49, %v133
    %v135 = vpop.f32.mrb[0].mxu0
    %v136 = vpop.f32.mrb[0].mxu0
    %v137 = vadd.f32 %v49, %v136
    %v138 = vpop.f32.mrb[0].mxu0
    %139 = vdwg.mxu0
    %v140 = vld [vmem:[%s3] sm:$0xff]
    %v141 = vld [vmem:[%s3 + $0x8] sm:$0xff]
    %v142 = vadd.f32 %v134, %v140
    %v143 = vadd.f32 %v137, %v141
    %vm144 = vcmask 261120
    %v145 = vsel %vm144, %v142, 0.0
    %146 = vadd.xlane.f32.xlu0 %v145
    %v147 = vpop.xlane.xlu0 %146
    %v148 = vsel %vm144, %v143, 0.0
    %149 = vadd.xlane.f32.xlu0 %v148
    %v150 = vpop.xlane.xlu0 %149
    %v151 = vrcp.pop 32.0
    %v152 = vmul.f32 %v147, %v151
    %v153 = vmul.f32 %v150, %v151
    %v154 = vsub.f32 %v142, %v152
    %v155 = vsub.f32 %v143, %v153
    %v156 = vmul.f32 %v154, %v154
    %v157 = vmul.f32 %v155, %v155
    %v158 = vsel %vm144, %v156, 0.0
    %159 = vadd.xlane.f32.xlu0 %v158
    %v160 = vpop.xlane.xlu0 %159
    %v161 = vsel %vm144, %v157, 0.0
    %162 = vadd.xlane.f32.xlu0 %v161
    %v163 = vpop.xlane.xlu0 %162
    %v164 = vmul.f32 %v160, %v151
    %v165 = vmul.f32 %v163, %v151
    %v166 = vadd.f32 %v164, 1e-12
    %v167 = vadd.f32 %v165, 1e-12
    %v168 = vrsqrt.pop %v166
    %v169 = vrsqrt.pop %v167
    %v170 = vmul.f32 %v154, %v168
    %v171 = vmul.f32 %v155, %v169
    %v172 = vld [vmem:[%s4] sm:$0x1]
    %v174 = vlaneseq
    %v175 = vshrl.u32 %v174, 7
    %v176 = vsub.s32 0, %v175
    %v177 = vrot.slane %v172, %v176
    %v179 = vmul.f32 %v170, %v177
    %v180 = vmul.f32 %v171, %v177
    %v181 = vld [vmem:[%s5] sm:$0x1]
    %v183 = vlaneseq
    %v184 = vshrl.u32 %v183, 7
    %v185 = vsub.s32 0, %v184
    %v186 = vrot.slane %v181, %v185
    %v188 = vadd.f32 %v179, %v186
    %v189 = vadd.f32 %v180, %v186
    %190 = vst.msk [vmem:[#allocation2] sm:$0xff] %vm144, %v188
    %191 = vst.msk [vmem:[#allocation2 + $0x8] sm:$0xff] %vm144, %v189
    // Predicated region
    $region26: #{bert_output.1} parent=1 // pred_check
      _
    $region27: #{bert_output.1} parent=1 // pred_check_branch
      %193 = sbr.rel (0) target = $region29
    $region28: #{bert_output.1} parent=1 // pred_region
      %s195 = ssub.s32 256, 256
      %196 = vsyncadd [#allocation3], %s195
      %s197 = sshll.u32 [#allocation2], 4
      %s198 = int_to_ptr.vmem [resolvable:$true] %s197
      %203 = dma.vmem_to_hbm [thread:$0]  %s198, 256, %s6, [#allocation3], 128, 128, 8
    $region29: #{bert_output.1} parent=1 // pred_fallthru
      _
    // Predicated region
    $region30: #{bert_output.1} parent=1 // pred_check
      _
    $region31: #{bert_output.1} parent=1 // pred_check_branch
      %205 = sbr.rel (0) target = $region33
    $region32: #{bert_output.1} parent=1 // pred_region
      %206 = dma.done [#allocation3], 256
    $region33: #{bert_output.1} parent=1 // pred_fallthru
      _
    %207 = vsyncpa [#allocation3], 1

</llo_original>
